<compile_context>
chip_gen: v5e
topology: v5e:2x2
jax: 0.10.0
libtpu: 0.0.40
codegen_flags: <defaults>
</compile_context>

<pallas_src>
import jax
import jax.numpy as jnp
from jax.experimental import pallas as pl
from jax.experimental.pallas import tpu as pltpu


def _linear_kernel(x_ref, w_ref, b_ref, o_ref):
    # x_ref: (TB, D) tile of the input batch (VMEM, streamed)
    # w_ref: (1, D)  classifier weight row (VMEM, resident across tiles)
    # b_ref: (1,)    classifier bias (SMEM scalar)
    # o_ref: (TB, 1) output logits for this tile
    x = x_ref[...].astype(jnp.float32)
    w = w_ref[...].astype(jnp.float32)                 # (1, D), broadcasts over rows
    logits = jnp.sum(x * w, axis=-1, keepdims=True)    # VPU mul + XLU lane-sum -> (TB, 1)
    o_ref[...] = (logits + b_ref[0]).astype(o_ref.dtype)


def _round_up(x, m):
    return ((x + m - 1) // m) * m


def _vmem_budget_bytes():
    # Double-buffered budget for the streamed x tile. v5e/v6e have 128 MiB of
    # VMEM so allow ~44 MiB; v7x has only 64 MiB per TensorCore, stay at 24 MiB.
    try:
        phys = int(pltpu.get_tpu_info().vmem_capacity_bytes)
    except Exception:
        phys = 64 << 20
    return (44 << 20) if phys >= (96 << 20) else (24 << 20)


def _pick_tile_b(batch, embedding_dim, itemsize, budget_bytes):
    # Sublane packing granularity: 8 (f32), 16 (bf16), 32 (int8).
    pack = max(8, 32 // max(1, itemsize))
    row_bytes = max(1, embedding_dim * itemsize)

    # Upper bound from the double-buffered VMEM budget for the x tile.
    tile_b = budget_bytes // (2 * row_bytes)
    # Bytes-based target (~8 MiB per tile) amortizes per-grid-step overhead.
    tile_b = min(tile_b, max(pack, (8 << 20) // row_bytes))

    # Keep at least two grid steps when possible so the "parallel" batch axis
    # can be split across v7x's two TensorCores.
    if batch >= 2 * pack:
        half = _round_up(-(-batch // 2), pack)  # round_up(ceil(batch/2), pack)
        tile_b = min(tile_b, half)

    if tile_b >= batch:
        # Whole batch fits in one tile: use the exact batch extent (a block
        # equal to the full array dim is always a legal layout); grid_b == 1.
        return int(batch)

    tile_b = max(pack, (tile_b // pack) * pack)
    return int(tile_b)


def sentence_classification_forward(x, weight, bias):
    """y = x @ weight.T + bias  (nn.Linear(embedding_dim, 1) forward).

    x: (B, D), weight: (1, D), bias: (1,).  Returns (B, 1) in x.dtype.
    """
    B, D = x.shape
    itemsize = jnp.dtype(x.dtype).itemsize
    tile_b = _pick_tile_b(B, D, itemsize, _vmem_budget_bytes())
    grid_b = pl.cdiv(B, tile_b)

    bias_sc = bias.astype(jnp.float32).reshape((1,))   # scalar path (SMEM)

    # double-buffered x tile + weight + output tiles + slack; clamp to 48 MiB
    # so the request always fits v7x's 64 MiB/TC physical VMEM.
    vmem_bytes = (2 * tile_b * D * itemsize) + (4 * D * itemsize) + (2 * tile_b * 4) + (2 << 20)
    vmem_bytes = int(min(max(vmem_bytes, 4 << 20), 48 << 20))

    return pl.pallas_call(
        _linear_kernel,
        out_shape=jax.ShapeDtypeStruct((B, 1), x.dtype),
        grid_spec=pltpu.PrefetchScalarGridSpec(
            num_scalar_prefetch=0,
            grid=(grid_b,),
            in_specs=[
                pl.BlockSpec((tile_b, D), lambda i: (i, 0)),        # x tile (streamed)
                pl.BlockSpec((1, D), lambda i: (0, 0)),             # weight (resident)
                pl.BlockSpec(memory_space=pltpu.MemorySpace.SMEM),  # bias scalar
            ],
            out_specs=pl.BlockSpec((tile_b, 1), lambda i: (i, 0)),
        ),
        compiler_params=pltpu.CompilerParams(
            dimension_semantics=("parallel",),  # v7x shards the batch grid across both TCs
            vmem_limit_bytes=vmem_bytes,
        ),
    )(x, weight, bias_sc)


if __name__ == "__main__":
    embedding_dim = 128
    key = jax.random.PRNGKey(0)
    kx, kw, kb = jax.random.split(key, 3)

    # Deterministic synthetic parameters (same shapes as nn.Linear(embedding_dim, 1)).
    weight = jax.random.normal(kw, (1, embedding_dim), dtype=jnp.float32) * 0.05
    bias = jax.random.normal(kb, (1,), dtype=jnp.float32) * 0.05

    # Case 1: small batch, single exact tile (no padding, no OOB).
    batch = 12
    x = jax.random.normal(kx, (batch, embedding_dim), dtype=jnp.float32)
    out = jax.block_until_ready(sentence_classification_forward(x, weight, bias))
    ref = x @ weight.T + bias
    assert out.shape == (batch, 1)
    assert jnp.allclose(out, ref, atol=1e-5, rtol=1e-5), "mismatch vs reference (batch=12)"

    # Case 2: multi-tile grid with a ragged final block (handled by the pipeline,
    # no wrapper-side padding) and >= 2 grid steps for megacore.
    batch2 = 40
    x2 = jax.random.normal(kx, (batch2, embedding_dim), dtype=jnp.float32)
    out2 = jax.block_until_ready(sentence_classification_forward(x2, weight, bias))
    ref2 = x2 @ weight.T + bias
    assert out2.shape == (batch2, 1)
    assert jnp.allclose(out2, ref2, atol=1e-5, rtol=1e-5), "mismatch vs reference (batch=40)"

    print("KERNEL_OK")
</pallas_src>

<mosaic_0001>
module attributes {stable_mosaic.version = 11 : i64} {
  func.func @_linear_kernel(%arg0: i32, %arg1: memref<12x128xf32, #tpu.memory_space<vmem>>, %arg2: memref<1x128xf32, #tpu.memory_space<vmem>>, %arg3: memref<1xf32, #tpu.memory_space<smem>>, %arg4: memref<12x1xf32, #tpu.memory_space<vmem>>) attributes {dimension_semantics = [#tpu.dimension_semantics<parallel>], iteration_bounds = array<i64: 1>, scalar_prefetch = 0 : i64, scratch_operands = 0 : i64, tpu.core_type = #tpu.core_type<tc>, window_params = [{transform_indices = @transform_0, window_bounds = array<i64: 12, 128>}, {pipeline_mode = #tpu.pipeline_mode<synchronous>, transform_indices = @transform_1, window_bounds = array<i64: 1, 128>}, {transform_indices = @transform_2, window_bounds = array<i64: 1>}, {transform_indices = @transform_3, window_bounds = array<i64: 12, 1>}]} {
    %c0 = arith.constant 0 : index
    %c0_0 = arith.constant 0 : index
    %0 = vector.load %arg1[%c0, %c0_0] : memref<12x128xf32, #tpu.memory_space<vmem>>, vector<12x128xf32>
    %c0_1 = arith.constant 0 : index
    %c0_2 = arith.constant 0 : index
    %1 = vector.load %arg2[%c0_1, %c0_2] : memref<1x128xf32, #tpu.memory_space<vmem>>, vector<1x128xf32>
    %2 = vector.broadcast %1 : vector<1x128xf32> to vector<12x128xf32>
    %3 = arith.mulf %0, %2 : vector<12x128xf32>
    %cst = arith.constant dense<0.000000e+00> : vector<12xf32>
    %4 = vector.multi_reduction <add>, %3, %cst [1] : vector<12x128xf32> to vector<12xf32>
    %5 = vector.shape_cast %4 : vector<12xf32> to vector<12x1xf32>
    %c0_3 = arith.constant 0 : index
    %6 = memref.load %arg3[%c0_3] : memref<1xf32, #tpu.memory_space<smem>>
    %7 = vector.broadcast %6 : f32 to vector<12x1xf32>
    %8 = arith.addf %5, %7 : vector<12x1xf32>
    %c0_4 = arith.constant 0 : index
    %c0_5 = arith.constant 0 : index
    %9 = vector.load %arg4[%c0_4, %c0_5] : memref<12x1xf32, #tpu.memory_space<vmem>>, vector<12x1xf32>
    tpu.vector_store %arg4[%c0_4, %c0_5], %8 {strides = array<i32>} : memref<12x1xf32, #tpu.memory_space<vmem>>, vector<12x1xf32>,
    return
  }
  func.func @transform_0(%arg0: i32) -> (i32, i32) {
    %c0_i32 = arith.constant 0 : i32
    %c0_i32_0 = arith.constant 0 : i32
    return %arg0, %c0_i32 : i32, i32
  }
  func.func @transform_1(%arg0: i32) -> (i32, i32) {
    %c0_i32 = arith.constant 0 : i32
    %c0_i32_0 = arith.constant 0 : i32
    %c0_i32_1 = arith.constant 0 : i32
    return %c0_i32, %c0_i32_0 : i32, i32
  }
  func.func @transform_2(%arg0: i32) -> i32 {
    %c0_i32 = arith.constant 0 : i32
    %c0_i32_0 = arith.constant 0 : i32
    return %c0_i32 : i32
  }
  func.func @transform_3(%arg0: i32) -> (i32, i32) {
    %c0_i32 = arith.constant 0 : i32
    %c0_i32_0 = arith.constant 0 : i32
    return %arg0, %c0_i32 : i32, i32
  }
}

</mosaic_0001>

<llo_original>
// kernel: tpu_custom_call.1
$region0: #{tpu_custom_call.1}
  #allocation0 [shape = 'u32[]', space=smem, size = 0x4, offset = 0x4, fixed_abs, tag = 'smem constant byte address 0x4 - core index']
  #allocation1 [shape = 'u32[72,128]{1,0:T(1,128)}', space=vmem, size = 0x9000, scoped, tag = 'internal scratch']
  #allocation2 [shape = 'f32[1]{0:T(128)S(6)}', space=smem, size = 0x200, scoped, tag = 'scoped memory for tpu_custom_call.1']
  %s0 = inlined_call_operand.hbm [shape: f32[12,128], index: 0, kind: input, shape index: {}]
  %s1 = inlined_call_operand.vmem [shape: f32[1,128], index: 1, kind: input, shape index: {}]
  %s2 = inlined_call_operand.<no memory space> [shape: f32[1], index: 2, kind: input, shape index: {}]
  %s3 = inlined_call_operand.vmem [shape: f32[12,1], index: 3, kind: output, shape index: {}]
  %s4 = sld [smem:[#allocation0]]
  $region26: #{tpu_custom_call.1} parent=0
    _
  %s6 = ssub.s32 1, %s4
  %s7 = scalar_select 0, %s6, %s4
  %8 = sst [smem:[#allocation2]] %s2
  $region1: #{tpu_custom_call.1} parent=0
    #allocation3 [shape = 'u8[8192]{0}', space=vmem, size = 0x2000, scoped, tag = 'input window, operand 0, single buffered']
    #allocation4 [shape = 's32[1]{0}', space=sflag, size = 0x4, scoped, tag = 'scoped memory for tpu_custom_call.1']
    %9 = vsyncpa [#allocation4], 0
    // Predicated region
    $region2: #{tpu_custom_call.1} parent=1 // pred_check
      _
    $region3: #{tpu_custom_call.1} parent=1 // pred_check_branch
      %11 = sbr.rel (0) target = $region5
    $region4: #{tpu_custom_call.1} parent=1 // pred_region
      %13 = vsyncadd [#allocation4], 0
      %s14 = sshll.u32 %s0, 4
      %s15 = int_to_ptr.hbm [resolvable:$true] %s14
      %s16 = sshll.u32 [#allocation3], 4
      %s17 = int_to_ptr.vmem [resolvable:$true] %s16
      %22 = dma.hbm_to_vmem [thread:$0]  %s15, 256, %s17, [#allocation4], 128, 128, 8
    $region5: #{tpu_custom_call.1} parent=1 // pred_fallthru
      _
    // Predicated region
    $region6: #{tpu_custom_call.1} parent=1 // pred_check
      _
    $region7: #{tpu_custom_call.1} parent=1 // pred_check_branch
      %24 = sbr.rel (0) target = $region9
    $region8: #{tpu_custom_call.1} parent=1 // pred_region
      _
    $region9: #{tpu_custom_call.1} parent=1 // pred_fallthru
      _
    // Predicated region
    $region10: #{tpu_custom_call.1} parent=1 // pred_check
      _
    $region11: #{tpu_custom_call.1} parent=1 // pred_check_branch
      %26 = sbr.rel (0) target = $region13
    $region12: #{tpu_custom_call.1} parent=1 // pred_region
      _
    $region13: #{tpu_custom_call.1} parent=1 // pred_fallthru
      _
    // Predicated region
    $region14: #{tpu_custom_call.1} parent=1 // pred_check
      _
    $region15: #{tpu_custom_call.1} parent=1 // pred_check_branch
      %28 = sbr.rel (0) target = $region17
    $region16: #{tpu_custom_call.1} parent=1 // pred_region
      %30 = dma.done [#allocation4], 256
    $region17: #{tpu_custom_call.1} parent=1 // pred_fallthru
      _
    %v31 = vld [vmem:[#allocation3] sm:$0xff]
    %v32 = vld [vmem:[#allocation3 + $0x8] sm:$0xf]
    %v33 = vld [vmem:[%s1] sm:$0x1]
    %v35 = vperm.slane %v33, 0
    %v37 = vmul.f32 %v31, %v35
    %v38 = vmul.f32 %v32, %v35
    %39 = vadd.xlane.f32.xlu0 %v37
    %v40 = vpop.xlane.xlu0 %39
    %vm41 = vcmask 1043456
    %v42 = vsel %vm41, %v38, 0.0
    %43 = vadd.xlane.f32.xlu0 %v42
    %v44 = vpop.xlane.xlu0 %43
    %s45 = sld [smem:[#allocation2]]
    %v46 = vstv %s45
    %v47 = vadd.f32 %v40, %v46
    %v48 = vadd.f32 %v44, %v46
    %vm49 = vcmask 7168
    %50 = vst.msk [vmem:[%s3] sm:$0xff] %vm49, %v47
    %vm51 = vcmask 3072
    %52 = vst.msk [vmem:[%s3 + $0x8] sm:$0xf] %vm51, %v48
    // Predicated region
    $region18: #{tpu_custom_call.1} parent=1 // pred_check
      _
    $region19: #{tpu_custom_call.1} parent=1 // pred_check_branch
      %54 = sbr.rel (0) target = $region21
    $region20: #{tpu_custom_call.1} parent=1 // pred_region
      _
    $region21: #{tpu_custom_call.1} parent=1 // pred_fallthru
      _
    // Predicated region
    $region22: #{tpu_custom_call.1} parent=1 // pred_check
      _
    $region23: #{tpu_custom_call.1} parent=1 // pred_check_branch
      %56 = sbr.rel (0) target = $region25
    $region24: #{tpu_custom_call.1} parent=1 // pred_region
      _
    $region25: #{tpu_custom_call.1} parent=1 // pred_fallthru
      _
    %57 = vsyncpa [#allocation4], 1

</llo_original>
